<compile_context>
chip_gen: v7x
topology: tpu7x:2x2x1
jax: 0.10.0
libtpu: 0.0.40
codegen_flags: <defaults>
</compile_context>

<pallas_src>
import functools

import jax
import jax.numpy as jnp
from jax.experimental import pallas as pl
from jax.experimental.pallas import tpu as pltpu

LANE = 128
TARGET_TILE_ROWS = 4096  # (4096,128) f32 = 2 MiB / operand / tile


def _focal_elementwise(x, t, alpha, gamma):
    """Plain-JAX focal loss (tail handling + reference)."""
    x = x.astype(jnp.float32)
    t = t.astype(jnp.float32)
    bce = jnp.maximum(x, 0.0) - x * t + jnp.log1p(jnp.exp(-jnp.abs(x)))
    pt = jnp.exp(-bce)
    return alpha * (1.0 - pt) ** gamma * bce


def _pow_gamma(base, gamma):
    # (1 - pt) ** gamma, specialized for small integer gamma so we don't pay
    # an extra exp/log pair on the single EUP slot.
    g = float(gamma)
    if g == int(g) and 0 <= int(g) <= 4:
        gi = int(g)
        if gi == 0:
            return jnp.ones_like(base)
        out = base
        for _ in range(gi - 1):
            out = out * base
        return out
    return jnp.power(base, g)


def _focal_loss_kernel(x_ref, t_ref, out_ref, *, alpha, gamma, rows_valid,
                       tile_rows, tiles_per_split, total_tiles, padded_tiles,
                       hard_targets):
    p = pl.program_id(0)   # megacore split ("parallel")
    i = pl.program_id(1)   # row-tile index ("arbitrary" reduction)
    tile_idx = p * tiles_per_split + i

    @pl.when(i == 0)
    def _():
        out_ref[...] = jnp.zeros_like(out_ref)

    x = x_ref[...].astype(jnp.float32)
    t = t_ref[...].astype(jnp.float32)

    # Numerically stable BCE-with-logits, reusing e = exp(-|x|):
    #   bce = max(x, 0) - x*t + log1p(exp(-|x|))
    e = jnp.exp(-jnp.abs(x))
    bce = jnp.maximum(x, 0.0) - x * t + jnp.log1p(e)

    if hard_targets:
        # pt = sigmoid(x) if t==1 else 1-sigmoid(x); saves one EUP exp.
        # Only exact for hard 0/1 targets (approx reciprocal -> tiny rel. err).
        wrong_side = jnp.logical_xor(x >= 0.0, t >= 0.5)
        pt = jnp.where(wrong_side, e, 1.0) * pl.reciprocal(1.0 + e, approx=True)
    else:
        pt = jnp.exp(-bce)  # exact PyTorch semantics (also defines soft-target case)

    focal = alpha * _pow_gamma(1.0 - pt, gamma) * bce

    def accum(val):
        # Cheap sublane reduce to a lane-wide (1,128) partial, accumulated into
        # the resident output block; the single cross-lane reduce + mean divide
        # happen once in the wrapper.
        out_ref[...] += jnp.sum(val, axis=0, keepdims=True)[None]

    needs_mask = (rows_valid % tile_rows != 0) or (padded_tiles != total_tiles)
    if not needs_mask:
        accum(focal)
    else:
        row_start = tile_idx * tile_rows
        tile_is_full = row_start + tile_rows <= rows_valid

        @pl.when(tile_is_full)
        def _():
            accum(focal)

        @pl.when(jnp.logical_not(tile_is_full))
        def _():
            # Boundary tile (Pallas-padded garbage rows) or the single clamped
            # over-count tile (fully masked): zero invalid rows before the sum.
            row_iota = jax.lax.broadcasted_iota(jnp.int32, focal.shape, 0)
            valid = (row_start + row_iota) < rows_valid
            accum(jnp.where(valid, focal, 0.0))


def focal_loss(inputs, targets, alpha=0.25, gamma=2.0, reduction="mean",
               hard_targets=False):
    assert inputs.shape == targets.shape
    if reduction not in ("mean", "sum"):
        # TODO(synk): reduction='none' would need an element-wise output kernel;
        # only 'mean'/'sum' are implemented here.
        raise NotImplementedError("reduction='none' is not implemented")

    n_elem = int(inputs.size)
    flat_x = inputs.reshape(-1)
    flat_t = targets.reshape(-1)

    n_main = (n_elem // LANE) * LANE
    rows = n_main // LANE
    tail = n_elem - n_main

    total = jnp.float32(0.0)

    if rows > 0:
        # Zero-copy (rows, 128) lane-dense view of the bulk. Only when a <128
        # tail exists do we take a prefix slice (no jnp.pad, no full copy).
        x2 = (flat_x if tail == 0 else flat_x[:n_main]).reshape(rows, LANE)
        t2 = (flat_t if tail == 0 else flat_t[:n_main]).reshape(rows, LANE)

        tile_rows = rows if rows <= TARGET_TILE_ROWS else TARGET_TILE_ROWS
        total_tiles = pl.cdiv(rows, tile_rows)
        gsplit = 2 if total_tiles >= 2 else 1          # v7x megacore split
        tiles_per_split = pl.cdiv(total_tiles, gsplit)
        padded_tiles = gsplit * tiles_per_split        # >= total_tiles (<= +1)

        if padded_tiles == total_tiles:
            idx_map = lambda p, i: (p * tiles_per_split + i, 0)
        else:
            # Clamp so the single over-count tile re-reads the last real block;
            # its contribution is masked to zero in the kernel.
            idx_map = lambda p, i: (
                jnp.minimum(p * tiles_per_split + i, total_tiles - 1), 0)

        kernel = functools.partial(
            _focal_loss_kernel,
            alpha=float(alpha), gamma=float(gamma),
            rows_valid=rows, tile_rows=tile_rows,
            tiles_per_split=tiles_per_split, total_tiles=total_tiles,
            padded_tiles=padded_tiles, hard_targets=bool(hard_targets))

        bytes_in = (x2.size * x2.dtype.itemsize) + (t2.size * t2.dtype.itemsize)
        partials = pl.pallas_call(
            kernel,
            out_shape=jax.ShapeDtypeStruct((gsplit, 1, LANE), jnp.float32),
            grid_spec=pltpu.PrefetchScalarGridSpec(
                num_scalar_prefetch=0,
                grid=(gsplit, tiles_per_split),
                in_specs=[
                    pl.BlockSpec((tile_rows, LANE), idx_map),
                    pl.BlockSpec((tile_rows, LANE), idx_map),
                ],
                out_specs=pl.BlockSpec((1, 1, LANE), lambda p, i: (p, 0, 0)),
            ),
            compiler_params=pltpu.CompilerParams(
                dimension_semantics=("parallel", "arbitrary"),
                vmem_limit_bytes=32 * 1024 * 1024,
            ),
            cost_estimate=pl.CostEstimate(
                flops=10 * rows * LANE,
                transcendentals=3 * rows * LANE,
                bytes_accessed=bytes_in + gsplit * LANE * 4),
        )(x2, t2)
        total = total + jnp.sum(partials)

    if tail > 0:
        total = total + jnp.sum(
            _focal_elementwise(flat_x[n_main:], flat_t[n_main:], alpha, gamma))

    if reduction == "mean":
        return total / jnp.float32(n_elem)
    return total


if __name__ == "__main__":
    key = jax.random.PRNGKey(0)
    k1, k2, k3, k4, k5, k6 = jax.random.split(key, 6)

    # 1) Detection-style logits/targets: [batch=2, channels=4, H=16, W=16].
    x1 = jax.random.normal(k1, (2, 4, 16, 16), dtype=jnp.float32)
    t1 = (jax.random.uniform(k2, (2, 4, 16, 16)) > 0.5).astype(jnp.float32)
    out1 = jax.block_until_ready(focal_loss(x1, t1))
    ref1 = _focal_elementwise(x1, t1, 0.25, 2.0).mean()
    assert jnp.allclose(out1, ref1, rtol=1e-5, atol=1e-6), (out1, ref1)

    out1s = jax.block_until_ready(focal_loss(x1, t1, reduction="sum"))
    ref1s = _focal_elementwise(x1, t1, 0.25, 2.0).sum()
    assert jnp.allclose(out1s, ref1s, rtol=2e-5, atol=1e-4), (out1s, ref1s)

    # 2) Non-multiple-of-128 element count -> zero-copy bulk + plain-JAX tail.
    x2 = jax.random.normal(k3, (3, 5, 7, 11), dtype=jnp.float32)
    t2 = (jax.random.uniform(k4, (3, 5, 7, 11)) > 0.5).astype(jnp.float32)
    out2 = jax.block_until_ready(focal_loss(x2, t2))
    ref2 = _focal_elementwise(x2, t2, 0.25, 2.0).mean()
    assert jnp.allclose(out2, ref2, rtol=1e-5, atol=1e-6), (out2, ref2)

    # 3) Anchor-style shape [2, 7200, 80]: multi-tile grid, megacore split,
    #    boundary mask + clamped over-count tile, bf16 hard targets
    #    (exact for 0/1 labels, half the target HBM bytes).
    x3 = jax.random.normal(k5, (2, 7200, 80), dtype=jnp.float32)
    t3 = (jax.random.uniform(k6, (2, 7200, 80)) > 0.5).astype(jnp.bfloat16)
    out3 = jax.block_until_ready(focal_loss(x3, t3))
    ref3 = _focal_elementwise(x3, t3, 0.25, 2.0).mean()
    assert jnp.allclose(out3, ref3, rtol=2e-4, atol=1e-6), (out3, ref3)

    # 4) Hard-target fast path (one fewer EUP exp + approx reciprocal).
    out4 = jax.block_until_ready(focal_loss(x1, t1, hard_targets=True))
    assert jnp.allclose(out4, ref1, rtol=5e-3, atol=1e-5), (out4, ref1)

    print("KERNEL_OK")
</pallas_src>

<mosaic_0001>
module attributes {stable_mosaic.version = 11 : i64} {
  func.func @_focal_loss_kernel(%arg0: i32, %arg1: i32, %arg2: memref<16x128xf32, #tpu.memory_space<vmem>>, %arg3: memref<16x128xf32, #tpu.memory_space<vmem>>, %arg4: memref<1x1x128xf32, #tpu.memory_space<vmem>>) attributes {dimension_semantics = [#tpu.dimension_semantics<parallel>, #tpu.dimension_semantics<arbitrary>], iteration_bounds = array<i64: 1, 1>, scalar_prefetch = 0 : i64, scratch_operands = 0 : i64, tpu.core_type = #tpu.core_type<tc>, window_params = [{transform_indices = @transform_0, window_bounds = array<i64: 16, 128>}, {transform_indices = @transform_1, window_bounds = array<i64: 16, 128>}, {transform_indices = @transform_2, window_bounds = array<i64: 1, 1, 128>}]} {
    %c0_i32 = arith.constant 0 : i32
    %0 = arith.cmpi eq, %arg1, %c0_i32 : i32
    %1 = arith.extui %0 : i1 to i32
    %c0_i32_0 = arith.constant 0 : i32
    %2 = arith.cmpi ne, %1, %c0_i32_0 : i32
    scf.if %2 {
      %cst_15 = arith.constant 0.000000e+00 : f32
      %30 = vector.broadcast %cst_15 : f32 to vector<1x1x128xf32>
      %c0_16 = arith.constant 0 : index
      %c0_17 = arith.constant 0 : index
      %c0_18 = arith.constant 0 : index
      %31 = vector.load %arg4[%c0_16, %c0_17, %c0_18] : memref<1x1x128xf32, #tpu.memory_space<vmem>>, vector<1x1x128xf32>
      tpu.vector_store %arg4[%c0_16, %c0_17, %c0_18], %30 {strides = array<i32>} : memref<1x1x128xf32, #tpu.memory_space<vmem>>, vector<1x1x128xf32>,
    } else {
    }
    %c0 = arith.constant 0 : index
    %c0_1 = arith.constant 0 : index
    %3 = vector.load %arg2[%c0, %c0_1] : memref<16x128xf32, #tpu.memory_space<vmem>>, vector<16x128xf32>
    %c0_2 = arith.constant 0 : index
    %c0_3 = arith.constant 0 : index
    %4 = vector.load %arg3[%c0_2, %c0_3] : memref<16x128xf32, #tpu.memory_space<vmem>>, vector<16x128xf32>
    %5 = math.absf %3 : vector<16x128xf32>
    %cst = arith.constant 0.000000e+00 : f32
    %6 = vector.broadcast %cst : f32 to vector<16x128xf32>
    %7 = arith.subf %6, %5 : vector<16x128xf32>
    %8 = math.exp %7 : vector<16x128xf32>
    %cst_4 = arith.constant 0.000000e+00 : f32
    %9 = vector.broadcast %cst_4 : f32 to vector<16x128xf32>
    %10 = arith.maximumf %3, %9 : vector<16x128xf32>
    %11 = arith.mulf %3, %4 : vector<16x128xf32>
    %12 = arith.subf %10, %11 : vector<16x128xf32>
    %13 = math.log1p %8 : vector<16x128xf32>
    %14 = arith.addf %12, %13 : vector<16x128xf32>
    %cst_5 = arith.constant 0.000000e+00 : f32
    %15 = vector.broadcast %cst_5 : f32 to vector<16x128xf32>
    %16 = arith.subf %15, %14 : vector<16x128xf32>
    %17 = math.exp %16 : vector<16x128xf32>
    %cst_6 = arith.constant 1.000000e+00 : f32
    %18 = vector.broadcast %cst_6 : f32 to vector<16x128xf32>
    %19 = arith.subf %18, %17 : vector<16x128xf32>
    %20 = arith.mulf %19, %19 : vector<16x128xf32>
    %cst_7 = arith.constant 2.500000e-01 : f32
    %21 = vector.broadcast %cst_7 : f32 to vector<16x128xf32>
    %22 = arith.mulf %21, %20 : vector<16x128xf32>
    %23 = arith.mulf %22, %14 : vector<16x128xf32>
    %c0_8 = arith.constant 0 : index
    %c0_9 = arith.constant 0 : index
    %c0_10 = arith.constant 0 : index
    %24 = vector.load %arg4[%c0_8, %c0_9, %c0_10] : memref<1x1x128xf32, #tpu.memory_space<vmem>>, vector<1x1x128xf32>
    %cst_11 = arith.constant dense<0.000000e+00> : vector<128xf32>
    %25 = vector.multi_reduction <add>, %23, %cst_11 [0] : vector<16x128xf32> to vector<128xf32>
    %26 = vector.shape_cast %25 : vector<128xf32> to vector<1x128xf32>
    %27 = vector.shape_cast %26 : vector<1x128xf32> to vector<1x1x128xf32>
    %28 = arith.addf %24, %27 : vector<1x1x128xf32>
    %c0_12 = arith.constant 0 : index
    %c0_13 = arith.constant 0 : index
    %c0_14 = arith.constant 0 : index
    %29 = vector.load %arg4[%c0_12, %c0_13, %c0_14] : memref<1x1x128xf32, #tpu.memory_space<vmem>>, vector<1x1x128xf32>
    tpu.vector_store %arg4[%c0_12, %c0_13, %c0_14], %28 {strides = array<i32>} : memref<1x1x128xf32, #tpu.memory_space<vmem>>, vector<1x1x128xf32>,
    return
  }
  func.func @transform_0(%arg0: i32, %arg1: i32) -> (i32, i32) {
    %c1_i32 = arith.constant 1 : i32
    %0 = arith.muli %arg0, %c1_i32 : i32
    %1 = arith.addi %0, %arg1 : i32
    %c0_i32 = arith.constant 0 : i32
    %c0_i32_0 = arith.constant 0 : i32
    return %1, %c0_i32 : i32, i32
  }
  func.func @transform_1(%arg0: i32, %arg1: i32) -> (i32, i32) {
    %c1_i32 = arith.constant 1 : i32
    %0 = arith.muli %arg0, %c1_i32 : i32
    %1 = arith.addi %0, %arg1 : i32
    %c0_i32 = arith.constant 0 : i32
    %c0_i32_0 = arith.constant 0 : i32
    return %1, %c0_i32 : i32, i32
  }
  func.func @transform_2(%arg0: i32, %arg1: i32) -> (i32, i32, i32) {
    %c0_i32 = arith.constant 0 : i32
    %c0_i32_0 = arith.constant 0 : i32
    %c0_i32_1 = arith.constant 0 : i32
    return %arg0, %c0_i32, %c0_i32_0 : i32, i32, i32
  }
}

</mosaic_0001>

<llo_original>
// kernel: tpu_custom_call.1
$region0: #{tpu_custom_call.1}
  #allocation0 [shape = 'u32[]', space=smem, size = 0x4, offset = 0x4, fixed_abs, tag = 'smem constant byte address 0x4 - core index']
  #allocation1 [shape = 'u32[144,128]{1,0:T(1,128)}', space=vmem, size = 0x12000, scoped, tag = 'internal scratch']
  %s0 = inlined_call_operand.hbm [shape: f32[16,128], index: 0, kind: input, shape index: {}]
  %s1 = inlined_call_operand.hbm [shape: f32[16,128], index: 1, kind: input, shape index: {}]
  %s2 = inlined_call_operand.hbm [shape: f32[1,1,128], index: 2, kind: output, shape index: {}]
  %s3 = sld [smem:[#allocation0]]
  $region30: #{tpu_custom_call.1} parent=0
    _
  %s5 = ssub.s32 1, %s3
  %s6 = scalar_select 0, %s5, %s3
  $region1: #{tpu_custom_call.1} parent=0
    #allocation2 [shape = 'u8[8192]{0}', space=vmem, size = 0x2000, scoped, tag = 'input window, operand 0, single buffered']
    #allocation3 [shape = 's32[1]{0}', space=sflag, size = 0x4, scoped, tag = 'scoped memory for tpu_custom_call.1']
    #allocation4 [shape = 's32[1]{0}', space=sflag, size = 0x4, scoped, tag = 'scoped memory for tpu_custom_call.1']
    #allocation5 [shape = 'u8[8192]{0}', space=vmem, size = 0x2000, scoped, tag = 'input window, operand 1, single buffered']
    #allocation6 [shape = 's32[1]{0}', space=sflag, size = 0x4, scoped, tag = 'scoped memory for tpu_custom_call.1']
    #allocation7 [shape = 'u8[512]{0}', space=vmem, size = 0x400, scoped, tag = 'output window, operand 0, single buffered']
    %7 = vsyncpa [#allocation3], 0
    %8 = vsyncpa [#allocation6], 0
    %9 = vsyncpa [#allocation4], 0
    // Predicated region
    $region2: #{tpu_custom_call.1} parent=1 // pred_check
      _
    $region3: #{tpu_custom_call.1} parent=1 // pred_check_branch
      %11 = sbr.rel (0) target = $region5
    $region4: #{tpu_custom_call.1} parent=1 // pred_region
      %s12 = sadd.s32 0, 0
      %s13 = smul.u32 2, %s12
      %s15 = ssub.s32 256, 256
      %16 = vsyncadd [#allocation3], %s15
      %s17 = smul.addr %s13, 128
      %s18 = scalar_lea.hbm %s0, %s17
      %s19 = sshll.u32 [#allocation2], 4
      %s20 = int_to_ptr.vmem [resolvable:$true] %s19
      %25 = dma.hbm_to_vmem [thread:$0]  %s18, 256, %s20, [#allocation3], 128, 128, 8
    $region5: #{tpu_custom_call.1} parent=1 // pred_fallthru
      _
    // Predicated region
    $region6: #{tpu_custom_call.1} parent=1 // pred_check
      _
    $region7: #{tpu_custom_call.1} parent=1 // pred_check_branch
      %27 = sbr.rel (0) target = $region9
    $region8: #{tpu_custom_call.1} parent=1 // pred_region
      %s28 = sadd.s32 0, 0
      %s29 = smul.u32 2, %s28
      %s31 = ssub.s32 256, 256
      %32 = vsyncadd [#allocation6], %s31
      %s33 = smul.addr %s29, 128
      %s34 = scalar_lea.hbm %s1, %s33
      %s35 = sshll.u32 [#allocation5], 4
      %s36 = int_to_ptr.vmem [resolvable:$true] %s35
      %41 = dma.hbm_to_vmem [thread:$0]  %s34, 256, %s36, [#allocation6], 128, 128, 8
    $region9: #{tpu_custom_call.1} parent=1 // pred_fallthru
      _
    // Predicated region
    $region10: #{tpu_custom_call.1} parent=1 // pred_check
      _
    $region11: #{tpu_custom_call.1} parent=1 // pred_check_branch
      %43 = sbr.rel (0) target = $region13
    $region12: #{tpu_custom_call.1} parent=1 // pred_region
      %44 = dma.done [#allocation3], 256
    $region13: #{tpu_custom_call.1} parent=1 // pred_fallthru
      _
    // Predicated region
    $region14: #{tpu_custom_call.1} parent=1 // pred_check
      _
    $region15: #{tpu_custom_call.1} parent=1 // pred_check_branch
      %46 = sbr.rel (0) target = $region17
    $region16: #{tpu_custom_call.1} parent=1 // pred_region
      %47 = dma.done [#allocation6], 256
    $region17: #{tpu_custom_call.1} parent=1 // pred_fallthru
      _
    %s48 = sadd.s32 0, 0
    %s49 = smul.u32 2, %s48
    %s50 = sadd.s32 0, 0
    %s51 = smul.u32 2, %s50
    %p52 = scmp.eq.s32.totalorder 0, 0
    // Predicated region
    $region18: #{tpu_custom_call.1} parent=1 // pred_check
      %p53 = pneg %p52
    $region19: #{tpu_custom_call.1} parent=1 // pred_check_branch
      %55 = sbr.rel (%p53) target = $region21
    $region20: #{tpu_custom_call.1} parent=1 // pred_region
      %56 = vst [vmem:[#allocation7] sm:$0x1] 0.0
    $region21: #{tpu_custom_call.1} parent=1 // pred_fallthru
      _
    %v57 = vld [vmem:[#allocation2] sm:$0xff]
    %v58 = vld [vmem:[#allocation2 + $0x8] sm:$0xff]
    %v59 = vld [vmem:[#allocation5] sm:$0xff]
    %v60 = vld [vmem:[#allocation5 + $0x8] sm:$0xff]
    %v61 = vand.u32 2147483647, %v57
    %v62 = vand.u32 2147483647, %v58
    %v63 = vsub.f32 0.0, %v61
    %v64 = vsub.f32 0.0, %v62
    %v65 = vmul.f32 %v63, 1.442695
    %v66 = vpow.pop %v65
    %v67 = vmul.f32 %v64, 1.442695
    %v68 = vpow.pop %v67
    %v69 = vmax.f32 %v57, 0.0
    %v70 = vmax.f32 %v58, 0.0
    %v71 = vmul.f32 %v57, %v59
    %v72 = vmul.f32 %v58, %v60
    %v73 = vsub.f32 %v69, %v71
    %v74 = vsub.f32 %v70, %v72
    %v75 = vadd.f32 %v66, 1.0
    %v76 = vlog2.pop %v75
    %v77 = vmul.f32 %v76, 0.6931472
    %v78 = vmul.f32 -0.5, %v66
    %v79 = vadd.f32 %v78, 1.0
    %v80 = vmul.f32 %v79, %v66
    %v81 = vand.u32 2147483647, %v66
    %vm82 = vcmp.lt.f32.partialorder %v81, 0.0004427343
    %v83 = vsel %vm82, %v80, %v77
    %v84 = vadd.f32 %v68, 1.0
    %v85 = vlog2.pop %v84
    %v86 = vmul.f32 %v85, 0.6931472
    %v87 = vmul.f32 -0.5, %v68
    %v88 = vadd.f32 %v87, 1.0
    %v89 = vmul.f32 %v88, %v68
    %v90 = vand.u32 2147483647, %v68
    %vm91 = vcmp.lt.f32.partialorder %v90, 0.0004427343
    %v92 = vsel %vm91, %v89, %v86
    %v93 = vadd.f32 %v73, %v83
    %v94 = vadd.f32 %v74, %v92
    %v95 = vsub.f32 0.0, %v93
    %v96 = vsub.f32 0.0, %v94
    %v97 = vmul.f32 %v95, 1.442695
    %v98 = vpow.pop %v97
    %v99 = vmul.f32 %v96, 1.442695
    %v100 = vpow.pop %v99
    %v101 = vsub.f32 1.0, %v98
    %v102 = vsub.f32 1.0, %v100
    %v103 = vmul.f32 %v101, %v101
    %v104 = vmul.f32 %v102, %v102
    %v105 = vmul.f32 %v103, 0.25
    %v106 = vmul.f32 %v104, 0.25
    %v107 = vmul.f32 %v105, %v93
    %v108 = vmul.f32 %v106, %v94
    %v109 = vld [vmem:[#allocation7] sm:$0x1]
    %v110 = vadd.f32 %v107, %v108
    %v111 = vrot.slane %v110, 4
    %v112 = vadd.f32 %v110, %v111
    %v113 = vrot.slane %v112, 2
    %v114 = vadd.f32 %v112, %v113
    %v115 = vrot.slane %v114, 1
    %v116 = vadd.f32 %v114, %v115
    %v117 = vadd.f32 %v109, %v116
    %118 = vst [vmem:[#allocation7] sm:$0x1] %v117
    // Predicated region
    $region22: #{tpu_custom_call.1} parent=1 // pred_check
      _
    $region23: #{tpu_custom_call.1} parent=1 // pred_check_branch
      %120 = sbr.rel (0) target = $region25
    $region24: #{tpu_custom_call.1} parent=1 // pred_region
      %s122 = ssub.s32 16, 16
      %123 = vsyncadd [#allocation4], %s122
      %s125 = sshll.u32 [#allocation7], 4
      %s126 = int_to_ptr.vmem [resolvable:$true] %s125
      %128 = dma.vmem_to_hbm [thread:$0]  %s126, 16, %s2, [#allocation4]
    $region25: #{tpu_custom_call.1} parent=1 // pred_fallthru
      _
    // Predicated region
    $region26: #{tpu_custom_call.1} parent=1 // pred_check
      _
    $region27: #{tpu_custom_call.1} parent=1 // pred_check_branch
      %130 = sbr.rel (0) target = $region29
    $region28: #{tpu_custom_call.1} parent=1 // pred_region
      %131 = dma.done [#allocation4], 16
    $region29: #{tpu_custom_call.1} parent=1 // pred_fallthru
      _
    %132 = vsyncpa [#allocation3], 1
    %133 = vsyncpa [#allocation6], 1
    %134 = vsyncpa [#allocation4], 1

</llo_original>
